<compile_context>
chip_gen: v6e
topology: v6e:2x2x1
jax: 0.10.0
libtpu: 0.0.40
codegen_flags: <defaults>
</compile_context>

<pallas_src>
import functools
import math

import numpy as np

import jax
import jax.numpy as jnp
from jax.experimental import pallas as pl
from jax.experimental.pallas import tpu as pltpu


# ----------------------------------------------------------------------------
# Kernel: one band of flattened pixels per grid step.
#   x_ref : (band, G*C_in)   channel-interleaved pixel slab (lane dim >= 128)
#   w_ref : (G*C_in, G*C_out) block-diagonal kron(I_G, W^T)
#   b_ref : (1, G*C_out)      bias tiled across the pixel group
#   o_ref : (band, G*C_out)
# Single MXU matmul + one VPU bias add + one unmasked lane-dense store.
# ----------------------------------------------------------------------------
def _conv_band_kernel(x_ref, w_ref, b_ref, o_ref):
    y = jnp.dot(x_ref[...], w_ref[...], preferred_element_type=jnp.float32)
    o_ref[...] = (y + b_ref[...].astype(jnp.float32)).astype(o_ref.dtype)


def _round_up(v, m):
    return ((v + m - 1) // m) * m


def conv1x1_pallas(x_rows, wblk, brow, *, band):
    rows_pad, lane_in = x_rows.shape
    lane_out = wblk.shape[1]
    itemsize = x_rows.dtype.itemsize

    # Explicit VMEM budget: double-buffered in/out blocks + constants + slack.
    blk_bytes = band * (lane_in + lane_out) * itemsize
    const_bytes = (lane_in * lane_out + lane_out) * itemsize
    vmem_bytes = int(2 * (blk_bytes + const_bytes)) + (2 << 20)
    vmem_bytes = max(vmem_bytes, 4 << 20)

    return pl.pallas_call(
        _conv_band_kernel,
        out_shape=jax.ShapeDtypeStruct((rows_pad, lane_out), x_rows.dtype),
        grid=(rows_pad // band,),
        in_specs=[
            pl.BlockSpec((band, lane_in), lambda i: (i, 0)),
            pl.BlockSpec((lane_in, lane_out), lambda i: (0, 0)),
            pl.BlockSpec((1, lane_out), lambda i: (0, 0)),
        ],
        out_specs=pl.BlockSpec((band, lane_out), lambda i: (i, 0)),
        compiler_params=pltpu.CompilerParams(
            dimension_semantics=("parallel",),
            vmem_limit_bytes=vmem_bytes),
    )(x_rows, wblk, brow)


# ----------------------------------------------------------------------------
# Wrapper = PatchSplitModel.forward (patch_combine_method='region_voting',
# img_dim=2, output_size=image_size, inner model = 1x1 Conv2d(C_in, C_out)).
# ----------------------------------------------------------------------------
def patch_split_forward(x, w, b, *, split_num=2, stride_num=2,
                        max_band_rows=512):
    bsz, c_in, h, wdt = x.shape
    c_out = w.shape[0]

    # ---- patch-split geometry (identical to the PyTorch module) ------------
    ps = h // split_num                 # patch_size
    s = ps // stride_num                # stride
    assert ps % s == 0, "patch_size must be divisible by stride"
    pad = s                             # pad_size
    hpad, wpad = h + 2 * pad, wdt + 2 * pad
    ppd_h = (hpad - ps) // s + 1        # patches per dim
    ppd_w = (wpad - ps) // s + 1

    # Region-voting identity precondition (trace-time, numpy): every cropped
    # output pixel is covered by >= 1 patch, so
    #   recon / divisor = (count * conv(x_pad)) / count = conv(x)  on the crop.
    cnt = np.zeros((hpad, wpad), np.float32)
    for i in range(ppd_h):
        for j in range(ppd_w):
            cnt[i * s:i * s + ps, j * s:j * s + ps] += 1.0
    assert (cnt[pad:pad + h, pad:pad + wdt] >= 1.0).all(), \
        "region-voting divisor would be zero inside the crop"

    # ---- lane-dense flattening: fold G pixels onto the lane axis -----------
    assert 128 % c_in == 0 and 128 % c_out == 0, \
        "demo layout assumes channel counts dividing 128"
    gpix = 128 // c_in                          # pixels per lane group
    lane_in, lane_out = gpix * c_in, gpix * c_out

    npix = bsz * h * wdt
    x_pix = jnp.transpose(x, (0, 2, 3, 1)).reshape(npix, c_in)   # NHWC pixels
    npix_pad = _round_up(npix, gpix)
    if npix_pad != npix:
        x_pix = jnp.pad(x_pix, ((0, npix_pad - npix), (0, 0)))
    rows = npix_pad // gpix
    x_rows = x_pix.reshape(rows, lane_in)

    # Row bands: multiple of 8 sublanes, padded so the grid divides evenly.
    band = min(max_band_rows, _round_up(rows, 8))
    rows_pad = _round_up(rows, band)
    if rows_pad != rows:
        x_rows = jnp.pad(x_rows, ((0, rows_pad - rows), (0, 0)))

    # ---- trace-time constants: block-diagonal weight + tiled bias ----------
    wblk = jnp.kron(jnp.eye(gpix, dtype=w.dtype), w.T).astype(x.dtype)
    brow = jnp.tile(b, gpix).reshape(1, lane_out).astype(jnp.float32)

    # ---- fused Pallas kernel ------------------------------------------------
    out_rows = conv1x1_pallas(x_rows, wblk, brow, band=band)

    # ---- glue: unflatten back to NCHW ---------------------------------------
    out_pix = out_rows[:rows].reshape(npix_pad, c_out)[:npix]
    out = out_pix.reshape(bsz, h, wdt, c_out)
    return jnp.transpose(out, (0, 3, 1, 2))


# ----------------------------------------------------------------------------
# Pure-JAX reference: the module's explicit pipeline
#   zero-pad -> unfold overlapping patches -> per-patch 1x1 conv ->
#   scatter-add fold (recon) -> scatter-add fold of ones (divisor) ->
#   recon / divisor -> crop.
# ----------------------------------------------------------------------------
def reference_forward(x, w, b, *, split_num=2, stride_num=2):
    bsz, c_in, h, wdt = x.shape
    ps = h // split_num
    s = ps // stride_num
    pad = s
    hpad, wpad = h + 2 * pad, wdt + 2 * pad
    ppd_h = (hpad - ps) // s + 1
    ppd_w = (wpad - ps) // s + 1
    x_pad = jnp.pad(x, ((0, 0), (0, 0), (pad, pad), (pad, pad)))
    recon = jnp.zeros((bsz, w.shape[0], hpad, wpad), jnp.float32)
    count = jnp.zeros((bsz, w.shape[0], hpad, wpad), jnp.float32)
    for i in range(ppd_h):
        for j in range(ppd_w):
            patch = x_pad[:, :, i * s:i * s + ps, j * s:j * s + ps]
            y = jnp.einsum("oc,bchw->bohw", w, patch) + b[None, :, None, None]
            recon = recon.at[:, :, i * s:i * s + ps, j * s:j * s + ps].add(y)
            count = count.at[:, :, i * s:i * s + ps, j * s:j * s + ps].add(1.0)
    out = recon / count
    return out[:, :, pad:pad + h, pad:pad + wdt]


if __name__ == "__main__":
    key = jax.random.PRNGKey(0)
    kx, kw, kb = jax.random.split(key, 3)

    # image_size=16, split_num=2 -> patch_size=8; stride_num=2 -> stride=4, pad=4
    B, C, H = 2, 4, 16
    x = jax.random.normal(kx, (B, C, H, H), dtype=jnp.float32)
    # deterministic inner-model params (1x1 Conv2d(C, C) with bias)
    Wm = jax.random.normal(kw, (C, C), dtype=jnp.float32) * 0.5
    bvec = jax.random.normal(kb, (C,), dtype=jnp.float32) * 0.1

    fwd = jax.jit(functools.partial(patch_split_forward,
                                    split_num=2, stride_num=2))
    out = jax.block_until_ready(fwd(x, Wm, bvec))

    ref = reference_forward(x, Wm, bvec, split_num=2, stride_num=2)
    assert out.shape == (B, C, H, H), out.shape
    max_err = float(jnp.max(jnp.abs(out - ref)))
    assert jnp.allclose(out, ref, atol=1e-4, rtol=1e-4), max_err

    print("KERNEL_OK")
</pallas_src>

<mosaic_0001>
module attributes {stable_mosaic.version = 11 : i64} {
  func.func @_conv_band_kernel(%arg0: i32, %arg1: memref<16x128xf32, #tpu.memory_space<vmem>>, %arg2: memref<128x128xf32, #tpu.memory_space<vmem>>, %arg3: memref<1x128xf32, #tpu.memory_space<vmem>>, %arg4: memref<16x128xf32, #tpu.memory_space<vmem>>) attributes {dimension_semantics = [#tpu.dimension_semantics<parallel>], iteration_bounds = array<i64: 1>, scalar_prefetch = 0 : i64, scratch_operands = 0 : i64, tpu.core_type = #tpu.core_type<tc>, window_params = [{transform_indices = @transform_0, window_bounds = array<i64: 16, 128>}, {pipeline_mode = #tpu.pipeline_mode<synchronous>, transform_indices = @transform_1, window_bounds = array<i64: 128, 128>}, {pipeline_mode = #tpu.pipeline_mode<synchronous>, transform_indices = @transform_2, window_bounds = array<i64: 1, 128>}, {transform_indices = @transform_3, window_bounds = array<i64: 16, 128>}]} {
    %c0 = arith.constant 0 : index
    %c0_0 = arith.constant 0 : index
    %0 = vector.load %arg1[%c0, %c0_0] : memref<16x128xf32, #tpu.memory_space<vmem>>, vector<16x128xf32>
    %c0_1 = arith.constant 0 : index
    %c0_2 = arith.constant 0 : index
    %1 = vector.load %arg2[%c0_1, %c0_2] : memref<128x128xf32, #tpu.memory_space<vmem>>, vector<128x128xf32>
    %cst = arith.constant dense<0.000000e+00> : vector<16x128xf32>
    %2 = tpu.matmul %0, %1, %cst {dimension_numbers = #tpu.dot_dimension_numbers<[1], [0], [0], [1], [0, 0, 1, 1], [], []>} : vector<16x128xf32>, vector<128x128xf32>, vector<16x128xf32> -> vector<16x128xf32>
    %c0_3 = arith.constant 0 : index
    %c0_4 = arith.constant 0 : index
    %3 = vector.load %arg3[%c0_3, %c0_4] : memref<1x128xf32, #tpu.memory_space<vmem>>, vector<1x128xf32>
    %4 = vector.broadcast %3 : vector<1x128xf32> to vector<16x128xf32>
    %5 = arith.addf %2, %4 : vector<16x128xf32>
    %c0_5 = arith.constant 0 : index
    %c0_6 = arith.constant 0 : index
    %6 = vector.load %arg4[%c0_5, %c0_6] : memref<16x128xf32, #tpu.memory_space<vmem>>, vector<16x128xf32>
    tpu.vector_store %arg4[%c0_5, %c0_6], %5 {strides = array<i32>} : memref<16x128xf32, #tpu.memory_space<vmem>>, vector<16x128xf32>,
    return
  }
  func.func @transform_0(%arg0: i32) -> (i32, i32) {
    %c0_i32 = arith.constant 0 : i32
    %c0_i32_0 = arith.constant 0 : i32
    return %arg0, %c0_i32 : i32, i32
  }
  func.func @transform_1(%arg0: i32) -> (i32, i32) {
    %c0_i32 = arith.constant 0 : i32
    %c0_i32_0 = arith.constant 0 : i32
    %c0_i32_1 = arith.constant 0 : i32
    return %c0_i32, %c0_i32_0 : i32, i32
  }
  func.func @transform_2(%arg0: i32) -> (i32, i32) {
    %c0_i32 = arith.constant 0 : i32
    %c0_i32_0 = arith.constant 0 : i32
    %c0_i32_1 = arith.constant 0 : i32
    return %c0_i32, %c0_i32_0 : i32, i32
  }
  func.func @transform_3(%arg0: i32) -> (i32, i32) {
    %c0_i32 = arith.constant 0 : i32
    %c0_i32_0 = arith.constant 0 : i32
    return %arg0, %c0_i32 : i32, i32
  }
}

</mosaic_0001>

<llo_original>
// kernel: tile.8
$region0: #{tile.8}
  #allocation0 [shape = 's32[1]{0}', space=sflag, size = 0x4, scoped, tag = 'scoped memory for tile.8']
  %s0 = inlined_call_operand.vmem [shape: f32[4], index: 0, kind: input, shape index: {}]
  %s1 = inlined_call_operand.vmem [shape: f32[32,4], index: 1, kind: output, shape index: {}]
  // Predicated region
  $region2: #{tile.8} parent=0 // pred_check
    _
  $region3: #{tile.8} parent=0 // pred_check_branch
    %3 = sbr.rel (0) target = $region5
  $region4: #{tile.8} parent=0 // pred_region
    _
  $region5: #{tile.8} parent=0 // pred_fallthru
    _
  %v4 = vld [vmem:[%s0] ss:$0 sm:$0xff]
  %5 = vst [vmem:[%s1] sm:$0xff] %v4
  %s6 = scalar_lea.vmem %s1, 8
  %7 = vst [vmem:[%s6] sm:$0xff] %v4
  %s8 = scalar_lea.vmem %s1, 16
  %9 = vst [vmem:[%s8] sm:$0xff] %v4
  %s10 = scalar_lea.vmem %s1, 24
  %11 = vst [vmem:[%s10] sm:$0xff] %v4

// kernel: tile.9
$region0: #{tile.9}
  %s0 = inlined_call_operand.vmem [shape: f32[32,4], index: 0, kind: input, shape index: {}]
  %s1 = inlined_call_operand.vmem [shape: f32[1,128], index: 1, kind: output, shape index: {}]
  $region1: #{tile.9} parent=0
    #allocation0 [shape = 'u8[4096]{0}', space=vmem, size = 0x1000, scoped, tag = 'scoped mem for output reshape']
    %v2 = vld [vmem:[%s0] sm:$0x1]
    %vm3 = vcmask 31744
    %4 = vst.msk [vmem:[#allocation0] sm:$0x1] %vm3, %v2
    %s5 = scalar_lea.vmem %s0, 31
    %v6 = vld [vmem:[%s5] sm:$0x1]
    %7 = vrot.lane.b32.xlu0 %v6, 124
    %v8 = vpop.permute.xlu0 %7
    %vm9 = vcmask 1048544
    %10 = vst.msk [vmem:[#allocation0] sm:$0x1] %vm9, %v8
    %s11 = scalar_lea.vmem %s0, 30
    %v12 = vld [vmem:[%s11] sm:$0x1]
    %13 = vrot.lane.b32.xlu0 %v12, 120
    %v14 = vpop.permute.xlu0 %13
    %vm15 = vcmask 1015744
    %16 = vst.msk [vmem:[#allocation0] sm:$0x1] %vm15, %v14
    %s17 = scalar_lea.vmem %s0, 29
    %v18 = vld [vmem:[%s17] sm:$0x1]
    %19 = vrot.lane.b32.xlu0 %v18, 116
    %v20 = vpop.permute.xlu0 %19
    %vm21 = vcmask 982944
    %22 = vst.msk [vmem:[#allocation0] sm:$0x1] %vm21, %v20
    %s23 = scalar_lea.vmem %s0, 28
    %v24 = vld [vmem:[%s23] sm:$0x1]
    %25 = vrot.lane.b32.xlu0 %v24, 112
    %v26 = vpop.permute.xlu0 %25
    %vm27 = vcmask 950144
    %28 = vst.msk [vmem:[#allocation0] sm:$0x1] %vm27, %v26
    %s29 = scalar_lea.vmem %s0, 27
    %v30 = vld [vmem:[%s29] sm:$0x1]
    %31 = vrot.lane.b32.xlu0 %v30, 108
    %v32 = vpop.permute.xlu0 %31
    %vm33 = vcmask 917344
    %34 = vst.msk [vmem:[#allocation0] sm:$0x1] %vm33, %v32
    %s35 = scalar_lea.vmem %s0, 26
    %v36 = vld [vmem:[%s35] sm:$0x1]
    %37 = vrot.lane.b32.xlu0 %v36, 104
    %v38 = vpop.permute.xlu0 %37
    %vm39 = vcmask 884544
    %40 = vst.msk [vmem:[#allocation0] sm:$0x1] %vm39, %v38
    %s41 = scalar_lea.vmem %s0, 25
    %v42 = vld [vmem:[%s41] sm:$0x1]
    %43 = vrot.lane.b32.xlu0 %v42, 100
    %v44 = vpop.permute.xlu0 %43
    %vm45 = vcmask 851744
    %46 = vst.msk [vmem:[#allocation0] sm:$0x1] %vm45, %v44
    %s47 = scalar_lea.vmem %s0, 24
    %v48 = vld [vmem:[%s47] sm:$0x1]
    %49 = vrot.lane.b32.xlu0 %v48, 96
    %v50 = vpop.permute.xlu0 %49
    %vm51 = vcmask 818944
    %52 = vst.msk [vmem:[#allocation0] sm:$0x1] %vm51, %v50
    %s53 = scalar_lea.vmem %s0, 23
    %v54 = vld [vmem:[%s53] sm:$0x1]
    %55 = vrot.lane.b32.xlu0 %v54, 92
    %v56 = vpop.permute.xlu0 %55
    %vm57 = vcmask 786144
    %58 = vst.msk [vmem:[#allocation0] sm:$0x1] %vm57, %v56
    %s59 = scalar_lea.vmem %s0, 22
    %v60 = vld [vmem:[%s59] sm:$0x1]
    %61 = vrot.lane.b32.xlu0 %v60, 88
    %v62 = vpop.permute.xlu0 %61
    %vm63 = vcmask 753344
    %64 = vst.msk [vmem:[#allocation0] sm:$0x1] %vm63, %v62
    %s65 = scalar_lea.vmem %s0, 21
    %v66 = vld [vmem:[%s65] sm:$0x1]
    %67 = vrot.lane.b32.xlu0 %v66, 84
    %v68 = vpop.permute.xlu0 %67
    %vm69 = vcmask 720544
    %70 = vst.msk [vmem:[#allocation0] sm:$0x1] %vm69, %v68
    %s71 = scalar_lea.vmem %s0, 20
    %v72 = vld [vmem:[%s71] sm:$0x1]
    %73 = vrot.lane.b32.xlu0 %v72, 80
    %v74 = vpop.permute.xlu0 %73
    %vm75 = vcmask 687744
    %76 = vst.msk [vmem:[#allocation0] sm:$0x1] %vm75, %v74
    %s77 = scalar_lea.vmem %s0, 19
    %v78 = vld [vmem:[%s77] sm:$0x1]
    %79 = vrot.lane.b32.xlu0 %v78, 76
    %v80 = vpop.permute.xlu0 %79
    %vm81 = vcmask 654944
    %82 = vst.msk [vmem:[#allocation0] sm:$0x1] %vm81, %v80
    %s83 = scalar_lea.vmem %s0, 18
    %v84 = vld [vmem:[%s83] sm:$0x1]
    %85 = vrot.lane.b32.xlu0 %v84, 72
    %v86 = vpop.permute.xlu0 %85
    %vm87 = vcmask 622144
    %88 = vst.msk [vmem:[#allocation0] sm:$0x1] %vm87, %v86
    %s89 = scalar_lea.vmem %s0, 17
    %v90 = vld [vmem:[%s89] sm:$0x1]
    %91 = vrot.lane.b32.xlu0 %v90, 68
    %v92 = vpop.permute.xlu0 %91
    %vm93 = vcmask 589344
    %94 = vst.msk [vmem:[#allocation0] sm:$0x1] %vm93, %v92
    %s95 = scalar_lea.vmem %s0, 16
    %v96 = vld [vmem:[%s95] sm:$0x1]
    %97 = vrot.lane.b32.xlu0 %v96, 64
    %v98 = vpop.permute.xlu0 %97
    %vm99 = vcmask 556544
    %100 = vst.msk [vmem:[#allocation0] sm:$0x1] %vm99, %v98
    %s101 = scalar_lea.vmem %s0, 15
    %v102 = vld [vmem:[%s101] sm:$0x1]
    %103 = vrot.lane.b32.xlu0 %v102, 60
    %v104 = vpop.permute.xlu0 %103
    %vm105 = vcmask 523744
    %106 = vst.msk [vmem:[#allocation0] sm:$0x1] %vm105, %v104
    %s107 = scalar_lea.vmem %s0, 14
    %v108 = vld [vmem:[%s107] sm:$0x1]
    %109 = vrot.lane.b32.xlu0 %v108, 56
    %v110 = vpop.permute.xlu0 %109
    %vm111 = vcmask 490944
    %112 = vst.msk [vmem:[#allocation0] sm:$0x1] %vm111, %v110
    %s113 = scalar_lea.vmem %s0, 13
    %v114 = vld [vmem:[%s113] sm:$0x1]
    %115 = vrot.lane.b32.xlu0 %v114, 52
    %v116 = vpop.permute.xlu0 %115
    %vm117 = vcmask 458144
    %118 = vst.msk [vmem:[#allocation0] sm:$0x1] %vm117, %v116
    %s119 = scalar_lea.vmem %s0, 12
    %v120 = vld [vmem:[%s119] sm:$0x1]
    %121 = vrot.lane.b32.xlu0 %v120, 48
    %v122 = vpop.permute.xlu0 %121
    %vm123 = vcmask 425344
    %124 = vst.msk [vmem:[#allocation0] sm:$0x1] %vm123, %v122
    %s125 = scalar_lea.vmem %s0, 11
    %v126 = vld [vmem:[%s125] sm:$0x1]
    %127 = vrot.lane.b32.xlu0 %v126, 44
    %v128 = vpop.permute.xlu0 %127
    %vm129 = vcmask 392544
    %130 = vst.msk [vmem:[#allocation0] sm:$0x1] %vm129, %v128
    %s131 = scalar_lea.vmem %s0, 10
    %v132 = vld [vmem:[%s131] sm:$0x1]
    %133 = vrot.lane.b32.xlu0 %v132, 40
    %v134 = vpop.permute.xlu0 %133
    %vm135 = vcmask 359744
    %136 = vst.msk [vmem:[#allocation0] sm:$0x1] %vm135, %v134
    %s137 = scalar_lea.vmem %s0, 9
    %v138 = vld [vmem:[%s137] sm:$0x1]
    %139 = vrot.lane.b32.xlu0 %v138, 36
    %v140 = vpop.permute.xlu0 %139
    %vm141 = vcmask 326944
    %142 = vst.msk [vmem:[#allocation0] sm:$0x1] %vm141, %v140
    %s143 = scalar_lea.vmem %s0, 8
    %v144 = vld [vmem:[%s143] sm:$0x1]
    %145 = vrot.lane.b32.xlu0 %v144, 32
    %v146 = vpop.permute.xlu0 %145
    %vm147 = vcmask 294144
    %148 = vst.msk [vmem:[#allocation0] sm:$0x1] %vm147, %v146
    %s149 = scalar_lea.vmem %s0, 7
    %v150 = vld [vmem:[%s149] sm:$0x1]
    %151 = vrot.lane.b32.xlu0 %v150, 28
    %v152 = vpop.permute.xlu0 %151
    %vm153 = vcmask 261344
    %154 = vst.msk [vmem:[#allocation0] sm:$0x1] %vm153, %v152
    %s155 = scalar_lea.vmem %s0, 6
    %v156 = vld [vmem:[%s155] sm:$0x1]
    %157 = vrot.lane.b32.xlu0 %v156, 24
    %v158 = vpop.permute.xlu0 %157
    %vm159 = vcmask 228544
    %160 = vst.msk [vmem:[#allocation0] sm:$0x1] %vm159, %v158
    %s161 = scalar_lea.vmem %s0, 5
    %v162 = vld [vmem:[%s161] sm:$0x1]
    %163 = vrot.lane.b32.xlu0 %v162, 20
    %v164 = vpop.permute.xlu0 %163
    %vm165 = vcmask 195744
    %166 = vst.msk [vmem:[#allocation0] sm:$0x1] %vm165, %v164
    %s167 = scalar_lea.vmem %s0, 4
    %v168 = vld [vmem:[%s167] sm:$0x1]
    %169 = vrot.lane.b32.xlu0 %v168, 16
    %v170 = vpop.permute.xlu0 %169
    %vm171 = vcmask 162944
    %172 = vst.msk [vmem:[#allocation0] sm:$0x1] %vm171, %v170
    %s173 = scalar_lea.vmem %s0, 3
    %v174 = vld [vmem:[%s173] sm:$0x1]
    %175 = vrot.lane.b32.xlu0 %v174, 12
    %v176 = vpop.permute.xlu0 %175
    %vm177 = vcmask 130144
    %178 = vst.msk [vmem:[#allocation0] sm:$0x1] %vm177, %v176
    %s179 = scalar_lea.vmem %s0, 2
    %v180 = vld [vmem:[%s179] sm:$0x1]
    %181 = vrot.lane.b32.xlu0 %v180, 8
    %v182 = vpop.permute.xlu0 %181
    %vm183 = vcmask 97344
    %184 = vst.msk [vmem:[#allocation0] sm:$0x1] %vm183, %v182
    %s185 = scalar_lea.vmem %s0, 1
    %v186 = vld [vmem:[%s185] sm:$0x1]
    %187 = vrot.lane.b32.xlu0 %v186, 4
    %v188 = vpop.permute.xlu0 %187
    %vm189 = vcmask 64544
    %190 = vst.msk [vmem:[#allocation0] sm:$0x1] %vm189, %v188
    %s192 = sshll.u32 1, 1
    %s193 = ssub.s32 %s192, 1
    %v195 = vld [vmem:[#allocation0] sm:%s193]
    %s196 = sshll.u32 1, 1
    %s197 = ssub.s32 %s196, 1
    %198 = vst [vmem:[%s1] sm:%s197] %v195

// kernel: patch_split_forward.1
$region0: #{patch_split_forward.1}
  #allocation0 [shape = 'u32[]', space=smem, size = 0x4, offset = 0x4, fixed_abs, tag = 'smem constant byte address 0x4 - core index']
  #allocation1 [shape = 'u32[144,128]{1,0:T(1,128)}', space=vmem, size = 0x12000, scoped, tag = 'internal scratch']
  %s0 = inlined_call_operand.vmem [shape: f32[16,128], index: 0, kind: input, shape index: {}]
  %s1 = inlined_call_operand.vmem [shape: f32[128,128], index: 1, kind: input, shape index: {}]
  %s2 = inlined_call_operand.vmem [shape: f32[1,128], index: 2, kind: input, shape index: {}]
  %s3 = inlined_call_operand.vmem [shape: f32[16,128], index: 3, kind: output, shape index: {}]
  %s4 = sld [smem:[#allocation0]]
  $region22: #{patch_split_forward.1} parent=0
    _
  %s6 = ssub.s32 1, %s4
  %s7 = scalar_select 0, %s6, %s4
  // Predicated region
  $region2: #{patch_split_forward.1} parent=0 // pred_check
    _
  $region3: #{patch_split_forward.1} parent=0 // pred_check_branch
    %9 = sbr.rel (0) target = $region5
  $region4: #{patch_split_forward.1} parent=0 // pred_region
    _
  $region5: #{patch_split_forward.1} parent=0 // pred_fallthru
    _
  // Predicated region
  $region6: #{patch_split_forward.1} parent=0 // pred_check
    _
  $region7: #{patch_split_forward.1} parent=0 // pred_check_branch
    %11 = sbr.rel (0) target = $region9
  $region8: #{patch_split_forward.1} parent=0 // pred_region
    _
  $region9: #{patch_split_forward.1} parent=0 // pred_fallthru
    _
  // Predicated region
  $region10: #{patch_split_forward.1} parent=0 // pred_check
    _
  $region11: #{patch_split_forward.1} parent=0 // pred_check_branch
    %13 = sbr.rel (0) target = $region13
  $region12: #{patch_split_forward.1} parent=0 // pred_region
    _
  $region13: #{patch_split_forward.1} parent=0 // pred_fallthru
    _
  %v14 = vld [vmem:[%s0] sm:$0xff]
  %v15 = vld [vmem:[%s0 + $0x8] sm:$0xff]
  %v16 = vld [vmem:[%s1] sm:$0xff]
  %v17 = vld [vmem:[%s1 + $0x8] sm:$0xff]
  %v18 = vld [vmem:[%s1 + $0x10] sm:$0xff]
  %v19 = vld [vmem:[%s1 + $0x18] sm:$0xff]
  %v20 = vld [vmem:[%s1 + $0x20] sm:$0xff]
  %v21 = vld [vmem:[%s1 + $0x28] sm:$0xff]
  %v22 = vld [vmem:[%s1 + $0x30] sm:$0xff]
  %v23 = vld [vmem:[%s1 + $0x38] sm:$0xff]
  %v24 = vld [vmem:[%s1 + $0x40] sm:$0xff]
  %v25 = vld [vmem:[%s1 + $0x48] sm:$0xff]
  %v26 = vld [vmem:[%s1 + $0x50] sm:$0xff]
  %v27 = vld [vmem:[%s1 + $0x58] sm:$0xff]
  %v28 = vld [vmem:[%s1 + $0x60] sm:$0xff]
  %v29 = vld [vmem:[%s1 + $0x68] sm:$0xff]
  %v30 = vld [vmem:[%s1 + $0x70] sm:$0xff]
  %v31 = vld [vmem:[%s1 + $0x78] sm:$0xff]
  %v32 = vld [vmem:[%s2] sm:$0x1]
  %v34 = vlaneseq
  %v35 = vshrl.u32 %v34, 7
  %v36 = vsub.s32 0, %v35
  %v37 = vrot.slane %v32, %v36
  %39 = vmatprep.subr.mxu0 0.0
  %40 = vmatpush1.msra.mxu0 %v31
  %41 = vmatprep.subr.mxu0 0.0
  %42 = vmatpush1.msra.mxu0 %v30
  %43 = vmatprep.subr.mxu0 0.0
  %44 = vmatpush1.msra.mxu0 %v29
  %45 = vmatprep.subr.mxu0 0.0
  %46 = vmatpush1.msra.mxu0 %v28
  %47 = vmatprep.subr.mxu0 0.0
  %48 = vmatpush1.msra.mxu0 %v27
  %49 = vmatprep.subr.mxu0 0.0
  %50 = vmatpush1.msra.mxu0 %v26
  %51 = vmatprep.subr.mxu0 0.0
  %52 = vmatpush1.msra.mxu0 %v25
  %53 = vmatprep.subr.mxu0 0.0
  %54 = vmatpush1.msra.mxu0 %v24
  %55 = vmatprep.subr.mxu0 0.0
  %56 = vmatpush1.msra.mxu0 %v23
  %57 = vmatprep.subr.mxu0 0.0
  %58 = vmatpush1.msra.mxu0 %v22
  %59 = vmatprep.subr.mxu0 0.0
  %60 = vmatpush1.msra.mxu0 %v21
  %61 = vmatprep.subr.mxu0 0.0
  %62 = vmatpush1.msra.mxu0 %v20
  %63 = vmatprep.subr.mxu0 0.0
  %64 = vmatpush1.msra.mxu0 %v19
  %65 = vmatprep.subr.mxu0 0.0
  %66 = vmatpush1.msra.mxu0 %v18
  %67 = vmatprep.subr.mxu0 0.0
  %68 = vmatpush1.msra.mxu0 %v17
  %69 = vmatprep.subr.mxu0 0.0
  %70 = vmatpush1.msra.mxu0 %v16
  %71 = vmatprep.subr.mxu0 0.0
  %72 = vmatpush2.msra.mxu0 0.0
  %73 = vmatprep.subr.mxu0 0.0
  %74 = vmatpush2.msra.mxu0 0.0
  %75 = vmatprep.subr.mxu0 0.0
  %76 = vmatpush2.msra.mxu0 0.0
  %77 = vmatprep.subr.mxu0 0.0
  %78 = vmatpush2.msra.mxu0 0.0
  %79 = vmatprep.subr.mxu0 0.0
  %80 = vmatpush2.msra.mxu0 0.0
  %81 = vmatprep.subr.mxu0 0.0
  %82 = vmatpush2.msra.mxu0 0.0
  %83 = vmatprep.subr.mxu0 0.0
  %84 = vmatpush2.msra.mxu0 0.0
  %85 = vmatprep.subr.mxu0 0.0
  %86 = vmatpush2.msra.mxu0 0.0
  %87 = vmatprep.subr.mxu0 0.0
  %88 = vmatpush2.msra.mxu0 0.0
  %89 = vmatprep.subr.mxu0 0.0
  %90 = vmatpush2.msra.mxu0 0.0
  %91 = vmatprep.subr.mxu0 0.0
  %92 = vmatpush2.msra.mxu0 0.0
  %93 = vmatprep.subr.mxu0 0.0
  %94 = vmatpush2.msra.mxu0 0.0
  %95 = vmatprep.subr.mxu0 0.0
  %96 = vmatpush2.msra.mxu0 0.0
  %97 = vmatprep.subr.mxu0 0.0
  %98 = vmatpush2.msra.mxu0 0.0
  %99 = vmatprep.subr.mxu0 0.0
  %100 = vmatpush2.msra.mxu0 0.0
  %101 = vmatprep.subr.mxu0 0.0
  %102 = vmatpush2.msra.mxu0 0.0
  %103 = vmatprep.mubr.f32.mxu0 0.0
  %104 = vmatmul.mubr.f32.gmra.mxu0 %v14
  %v105 = vpop.f32.mrf.mxu0
  %v106 = vadd.f32 %v37, %v105
  %v107 = vpop.f32.mrf.mxu0
  %108 = vmatprep.mubr.f32.mxu0 0.0
  %109 = vmatmul.mubr.f32.gmra.mxu0 %v15
  %v110 = vpop.f32.mrf.mxu0
  %v111 = vadd.f32 %v37, %v110
  %v112 = vpop.f32.mrf.mxu0
  %113 = vdwg.mxu0
  %114 = vst [vmem:[%s3] sm:$0xff] %v106
  %115 = vst [vmem:[%s3 + $0x8] sm:$0xff] %v111
  // Predicated region
  $region14: #{patch_split_forward.1} parent=0 // pred_check
    _
  $region15: #{patch_split_forward.1} parent=0 // pred_check_branch
    %117 = sbr.rel (0) target = $region17
  $region16: #{patch_split_forward.1} parent=0 // pred_region
    _
  $region17: #{patch_split_forward.1} parent=0 // pred_fallthru
    _
  // Predicated region
  $region18: #{patch_split_forward.1} parent=0 // pred_check
    _
  $region19: #{patch_split_forward.1} parent=0 // pred_check_branch
    %119 = sbr.rel (0) target = $region21
  $region20: #{patch_split_forward.1} parent=0 // pred_region
    _
  $region21: #{patch_split_forward.1} parent=0 // pred_fallthru
    _

</llo_original>
